<compile_context>
chip_gen: v6e
topology: v6e:2x2x1
jax: 0.10.0
libtpu: 0.0.40
codegen_flags: <defaults>
</compile_context>

<pallas_src>
import jax
import jax.numpy as jnp
import numpy as np
from jax.experimental import pallas as pl
from jax.experimental.pallas import tpu as pltpu

BN_EPS = 1e-5
LANE = 128


def _round_up(x, m):
    return ((x + m - 1) // m) * m


def _vmem_capacity_bytes():
    """Physical VMEM per TensorCore (128 MiB on v5e/v6e, 64 MiB on v7x)."""
    try:
        info = pltpu.get_tpu_info()
        cap = getattr(info, "vmem_capacity_bytes", None)
        if cap:
            return int(cap)
    except Exception:
        pass
    return 128 * (1 << 20)


def _make_residual_kernel(N, L, Cpi, Cpo, use_conv3, compute_dtype):
    def conv3tap(v_nlc, w_ref):
        """3-tap same-padding conv: three per-tap MXU matmuls, f32 accumulation.

        No (N, L, 3C) lane-axis im2col buffer; only two sublane-shifted bf16 views.
        w_ref has shape (3, C, Cpo): tap 0 pairs with x[t-1], tap 1 with x[t],
        tap 2 with x[t+1].
        """
        C = v_nlc.shape[-1]
        zero = jnp.zeros((N, 1, C), v_nlc.dtype)
        left = jnp.concatenate([zero, v_nlc[:, :L - 1, :]], axis=1)   # x[t-1]
        right = jnp.concatenate([v_nlc[:, 1:, :], zero], axis=1)      # x[t+1]
        y = jnp.dot(left.reshape(N * L, C), w_ref[0],
                    preferred_element_type=jnp.float32)
        y = y + jnp.dot(v_nlc.reshape(N * L, C), w_ref[1],
                        preferred_element_type=jnp.float32)
        y = y + jnp.dot(right.reshape(N * L, C), w_ref[2],
                        preferred_element_type=jnp.float32)
        return y                                                      # (N*L, Cpo) f32

    def batchnorm(y, g_row, be_row):
        """Training-mode BN: one-pass stats, gamma folded into scale (all f32)."""
        inv_n = 1.0 / float(N * L)
        mean = jnp.sum(y, axis=0, keepdims=True) * inv_n
        mean_sq = jnp.sum(y * y, axis=0, keepdims=True) * inv_n
        # Clamp: E[y^2] - E[y]^2 can cancel slightly negative in f32.
        var = jnp.maximum(mean_sq - mean * mean, 0.0)
        scale = g_row * jax.lax.rsqrt(var + BN_EPS)
        return y * scale + (be_row - mean * scale)

    def kernel(x_ref, w1_ref, g1_ref, be1_ref, w2_ref, g2_ref, be2_ref, *rest):
        if use_conv3:
            w3_ref, b3_ref, o_ref = rest
        else:
            (o_ref,) = rest

        x = x_ref[...]                                              # (N, L, Cpi) bf16

        # conv1 (k=3, pad=1); bias dropped -- exactly cancelled by bn1's mean subtraction
        y = conv3tap(x, w1_ref)                                     # (N*L, Cpo) f32

        # residual branch right after conv1 so x's live range ends early
        xf = x.reshape(N * L, Cpi)
        if use_conv3:
            res = jnp.dot(xf, w3_ref[...],
                          preferred_element_type=jnp.float32) + b3_ref[...]
        else:
            # keep the skip in bf16; promoted to f32 only at the final add (Cpi == Cpo)
            res = xf

        # bn1 + relu (f32)
        y = jnp.maximum(batchnorm(y, g1_ref[...], be1_ref[...]), 0.0)

        # conv2 (k=3, pad=1); bias dropped -- cancelled by bn2
        y2 = conv3tap(y.astype(compute_dtype).reshape(N, L, Cpo), w2_ref)
        y2 = batchnorm(y2, g2_ref[...], be2_ref[...])

        # add + relu; output is lane-dense (last dim = padded channels, mult. of 128)
        out = jnp.maximum(y2 + res, 0.0).reshape(N, L, Cpo)
        o_ref[...] = out.astype(o_ref.dtype)

    return kernel


def residual_forward(x_ncl, params, *, use_1x1conv, strides=1,
                     compute_dtype=jnp.bfloat16,
                     out_dtype=jnp.float32, out_layout="NCL"):
    """x_ncl: (N, C_in, L) float32, PyTorch Conv1d layout.

    out_layout="NCL": crop channel padding and transpose back (PyTorch-identical).
    out_layout="NLC": return the kernel's lane-dense (N, L, Cpad) output directly;
    combine with out_dtype=bf16 to halve writeback bytes and skip the extra
    crop+transpose HBM pass when chaining NLC layers.
    """
    assert strides == 1, "kernel implements strides=1 only"
    N, Cin, L = x_ncl.shape
    Cout = params["w1"].shape[0]
    if not use_1x1conv:
        assert Cin == Cout, "identity residual requires input_channels == num_channels"

    Cpi = _round_up(Cin, LANE)
    Cpo = _round_up(Cout, LANE)

    # NCL -> NLC (channels on lane axis), pad channels to lane width, cast to bf16
    x_nlc = jnp.transpose(x_ncl, (0, 2, 1))
    x_nlc = jnp.pad(x_nlc, ((0, 0), (0, 0), (0, Cpi - Cin))).astype(compute_dtype)

    def conv_w(w_oik, cpi, cpo):
        # PyTorch Conv1d weight (Cout, Cin, K) -> per-tap stack (K, cpi, cpo), bf16
        w = jnp.transpose(w_oik, (2, 1, 0))                      # (K, Cin, Cout)
        w = jnp.pad(w, ((0, 0), (0, cpi - w.shape[1]), (0, cpo - w.shape[2])))
        return w.astype(compute_dtype)

    def row(v, cpo):                                             # per-channel f32 row
        return jnp.pad(v, (0, cpo - v.shape[0])).reshape(1, cpo).astype(jnp.float32)

    # conv1/conv2 biases are NOT passed: training-mode BN cancels them exactly.
    args = [x_nlc,
            conv_w(params["w1"], Cpi, Cpo), row(params["g1"], Cpo), row(params["be1"], Cpo),
            conv_w(params["w2"], Cpo, Cpo), row(params["g2"], Cpo), row(params["be2"], Cpo)]
    if use_1x1conv:
        args += [conv_w(params["w3"], Cpi, Cpo)[0], row(params["b3"], Cpo)]

    kernel = _make_residual_kernel(N, L, Cpi, Cpo, use_1x1conv, compute_dtype)
    vmem = pl.BlockSpec(memory_space=pltpu.MemorySpace.VMEM)

    out_shape = jax.ShapeDtypeStruct((N, L, Cpo), out_dtype)
    out_bytes = int(np.prod(out_shape.shape)) * np.dtype(out_dtype).itemsize
    in_bytes = sum(int(np.prod(a.shape)) * a.dtype.itemsize for a in args)

    # Generation-aware scoped-VMEM limit: always set (defaults are 16 MiB on v5e,
    # 32 MiB on v6e/v7x), but never above physical capacity minus pipelining
    # headroom (64 MiB physical on v7x; 128 MiB on v5e/v6e).
    act_bytes = N * L * (8 * Cpi + 22 * Cpo)   # bf16 shifted views + f32 temporaries
    est = in_bytes + out_bytes + act_bytes
    vmem_cap = _vmem_capacity_bytes()
    limit = min(max(2 * est, 32 * (1 << 20)),
                min(vmem_cap - 8 * (1 << 20), 100 * (1 << 20)))
    compiler_params = pltpu.CompilerParams(vmem_limit_bytes=int(limit))

    # Advisory cost hint so XLA schedules the surrounding transpose/pad sensibly.
    mxu_flops = 2 * N * L * Cpo * (3 * Cpi + 3 * Cpo + (Cpi if use_1x1conv else 0))
    cost = pl.CostEstimate(flops=int(mxu_flops + 14 * N * L * Cpo),
                           transcendentals=int(2 * Cpo),
                           bytes_accessed=int(in_bytes + out_bytes))

    y_nlc = pl.pallas_call(
        kernel,
        out_shape=out_shape,
        in_specs=[vmem] * len(args),
        out_specs=vmem,
        compiler_params=compiler_params,
        cost_estimate=cost,
    )(*args)

    if out_layout == "NLC":
        return y_nlc                                             # lane-dense, padded C
    return jnp.transpose(y_nlc[:, :, :Cout], (0, 2, 1))          # NLC -> NCL, drop pad


def init_params(key, Cin, Cout, use_1x1conv):
    """Deterministic PyTorch-style init (uniform +/-1/sqrt(fan_in); BN gamma=1, beta=0)."""
    ks = jax.random.split(key, 3)

    def conv_init(k, cout, cin, ksz):
        bound = 1.0 / float(np.sqrt(cin * ksz))
        kw, kb = jax.random.split(k)
        w = jax.random.uniform(kw, (cout, cin, ksz), jnp.float32, -bound, bound)
        b = jax.random.uniform(kb, (cout,), jnp.float32, -bound, bound)
        return w, b

    p = {}
    p["w1"], p["b1"] = conv_init(ks[0], Cout, Cin, 3)
    p["w2"], p["b2"] = conv_init(ks[1], Cout, Cout, 3)
    if use_1x1conv:
        p["w3"], p["b3"] = conv_init(ks[2], Cout, Cin, 1)
    p["g1"] = jnp.ones((Cout,), jnp.float32)
    p["be1"] = jnp.zeros((Cout,), jnp.float32)
    p["g2"] = jnp.ones((Cout,), jnp.float32)
    p["be2"] = jnp.zeros((Cout,), jnp.float32)
    return p


def residual_reference(x, p, use_1x1conv, compute_dtype=jnp.float32):
    """Pure-JAX reference (NCL), PyTorch training-mode forward.
    compute_dtype=bf16 mirrors the precision the kernel feeds the MXU (bf16 inputs,
    f32 accumulation); compute_dtype=f32 is the exact full-precision semantics.
    Note: the reference keeps the conv1/conv2 biases; the kernel drops them because
    BN's mean subtraction cancels them exactly, so results agree."""
    prec = (jax.lax.Precision.HIGHEST if compute_dtype == jnp.float32
            else jax.lax.Precision.DEFAULT)

    def conv1d(v, w, b, pad):
        y = jax.lax.conv_general_dilated(
            v.astype(compute_dtype), w.astype(compute_dtype),
            window_strides=(1,), padding=[(pad, pad)],
            dimension_numbers=("NCH", "OIH", "NCH"),
            preferred_element_type=jnp.float32, precision=prec)
        return y + b.astype(jnp.float32)[None, :, None]

    def bn(v, g, bt):
        m = jnp.mean(v, axis=(0, 2), keepdims=True)
        var = jnp.mean((v - m) ** 2, axis=(0, 2), keepdims=True)
        return (v - m) * jax.lax.rsqrt(var + BN_EPS) * g[None, :, None] + bt[None, :, None]

    y = jax.nn.relu(bn(conv1d(x, p["w1"], p["b1"], 1), p["g1"], p["be1"]))
    y = bn(conv1d(y, p["w2"], p["b2"], 1), p["g2"], p["be2"])
    if use_1x1conv:
        xr = conv1d(x, p["w3"], p["b3"], 0)
    else:
        xr = x.astype(compute_dtype).astype(jnp.float32)
    return jax.nn.relu(y + xr)


if __name__ == "__main__":
    key = jax.random.PRNGKey(0)
    kx, kp1, kp2 = jax.random.split(key, 3)

    N, Cin, Cout, L = 2, 4, 8, 16

    # Case 1: projection residual (use_1x1conv=True, Cin != Cout)
    x = jax.random.normal(kx, (N, Cin, L), jnp.float32)
    p = init_params(kp1, Cin, Cout, True)
    out = jax.block_until_ready(residual_forward(x, p, use_1x1conv=True, strides=1))
    assert out.shape == (N, Cout, L)
    ref_match = residual_reference(x, p, True, compute_dtype=jnp.bfloat16)
    ref_f32 = residual_reference(x, p, True, compute_dtype=jnp.float32)
    np.testing.assert_allclose(np.asarray(out), np.asarray(ref_match),
                               atol=2e-3, rtol=2e-3)   # exact kernel numerics
    np.testing.assert_allclose(np.asarray(out), np.asarray(ref_f32),
                               atol=1e-1, rtol=1e-1)   # bf16-compute sanity check

    # Case 2: identity residual (use_1x1conv=False, Cin == Cout)
    x2 = jax.random.normal(kx, (N, Cout, L), jnp.float32)
    p2 = init_params(kp2, Cout, Cout, False)
    out2 = jax.block_until_ready(residual_forward(x2, p2, use_1x1conv=False, strides=1))
    assert out2.shape == (N, Cout, L)
    ref2 = residual_reference(x2, p2, False, compute_dtype=jnp.bfloat16)
    np.testing.assert_allclose(np.asarray(out2), np.asarray(ref2),
                               atol=2e-3, rtol=2e-3)

    # Case 3: low-HBM-traffic path for layer chaining (bf16 output, lane-dense NLC)
    out3 = jax.block_until_ready(residual_forward(
        x, p, use_1x1conv=True, out_dtype=jnp.bfloat16, out_layout="NLC"))
    assert out3.shape == (N, L, _round_up(Cout, LANE)) and out3.dtype == jnp.bfloat16
    np.testing.assert_allclose(
        np.asarray(out3[:, :, :Cout].astype(jnp.float32)),
        np.transpose(np.asarray(ref_match), (0, 2, 1)),
        atol=3e-2, rtol=3e-2)                           # bf16 output rounding

    print("KERNEL_OK")
</pallas_src>

<mosaic_0001>
module attributes {stable_mosaic.version = 11 : i64} {
  func.func @kernel(%arg0: memref<2x16x128xbf16, #tpu.memory_space<vmem>>, %arg1: memref<3x128x128xbf16, #tpu.memory_space<vmem>>, %arg2: memref<1x128xf32, #tpu.memory_space<vmem>>, %arg3: memref<1x128xf32, #tpu.memory_space<vmem>>, %arg4: memref<3x128x128xbf16, #tpu.memory_space<vmem>>, %arg5: memref<1x128xf32, #tpu.memory_space<vmem>>, %arg6: memref<1x128xf32, #tpu.memory_space<vmem>>, %arg7: memref<128x128xbf16, #tpu.memory_space<vmem>>, %arg8: memref<1x128xf32, #tpu.memory_space<vmem>>, %arg9: memref<2x16x128xf32, #tpu.memory_space<vmem>>) attributes {dimension_semantics = [], scalar_prefetch = 0 : i64, scratch_operands = 0 : i64, tpu.core_type = #tpu.core_type<tc>} {
    %c0 = arith.constant 0 : index
    %c0_0 = arith.constant 0 : index
    %c0_1 = arith.constant 0 : index
    %0 = vector.load %arg0[%c0, %c0_0, %c0_1] : memref<2x16x128xbf16, #tpu.memory_space<vmem>>, vector<2x16x128xbf16>
    %cst = arith.constant 0.000000e+00 : bf16
    %1 = vector.broadcast %cst : bf16 to vector<2x1x128xbf16>
    %2 = vector.extract_strided_slice %0 {offsets = [0, 0, 0], sizes = [2, 15, 128], strides = [1, 1, 1]} : vector<2x16x128xbf16> to vector<2x15x128xbf16>
    %3 = tpu.concatenate %1, %2 in 1 : vector<2x1x128xbf16>, vector<2x15x128xbf16> -> vector<2x16x128xbf16>
    %4 = vector.extract_strided_slice %0 {offsets = [0, 1, 0], sizes = [2, 15, 128], strides = [1, 1, 1]} : vector<2x16x128xbf16> to vector<2x15x128xbf16>
    %5 = tpu.concatenate %4, %1 in 1 : vector<2x15x128xbf16>, vector<2x1x128xbf16> -> vector<2x16x128xbf16>
    %6 = vector.shape_cast %3 : vector<2x16x128xbf16> to vector<32x128xbf16>
    %c0_2 = arith.constant 0 : index
    %c0_3 = arith.constant 0 : index
    %c0_4 = arith.constant 0 : index
    %7 = vector.load %arg1[%c0_2, %c0_3, %c0_4] : memref<3x128x128xbf16, #tpu.memory_space<vmem>>, vector<1x128x128xbf16>
    %8 = vector.shape_cast %7 : vector<1x128x128xbf16> to vector<128x128xbf16>
    %cst_5 = arith.constant dense<0.000000e+00> : vector<32x128xf32>
    %9 = tpu.matmul %6, %8, %cst_5 {dimension_numbers = #tpu.dot_dimension_numbers<[1], [0], [0], [1], [0, 0, 1, 1], [], []>} : vector<32x128xbf16>, vector<128x128xbf16>, vector<32x128xf32> -> vector<32x128xf32>
    %10 = vector.shape_cast %0 : vector<2x16x128xbf16> to vector<32x128xbf16>
    %c1 = arith.constant 1 : index
    %c0_6 = arith.constant 0 : index
    %c0_7 = arith.constant 0 : index
    %11 = vector.load %arg1[%c1, %c0_6, %c0_7] : memref<3x128x128xbf16, #tpu.memory_space<vmem>>, vector<1x128x128xbf16>
    %12 = vector.shape_cast %11 : vector<1x128x128xbf16> to vector<128x128xbf16>
    %cst_8 = arith.constant dense<0.000000e+00> : vector<32x128xf32>
    %13 = tpu.matmul %10, %12, %cst_8 {dimension_numbers = #tpu.dot_dimension_numbers<[1], [0], [0], [1], [0, 0, 1, 1], [], []>} : vector<32x128xbf16>, vector<128x128xbf16>, vector<32x128xf32> -> vector<32x128xf32>
    %14 = arith.addf %9, %13 : vector<32x128xf32>
    %15 = vector.shape_cast %5 : vector<2x16x128xbf16> to vector<32x128xbf16>
    %c2 = arith.constant 2 : index
    %c0_9 = arith.constant 0 : index
    %c0_10 = arith.constant 0 : index
    %16 = vector.load %arg1[%c2, %c0_9, %c0_10] : memref<3x128x128xbf16, #tpu.memory_space<vmem>>, vector<1x128x128xbf16>
    %17 = vector.shape_cast %16 : vector<1x128x128xbf16> to vector<128x128xbf16>
    %cst_11 = arith.constant dense<0.000000e+00> : vector<32x128xf32>
    %18 = tpu.matmul %15, %17, %cst_11 {dimension_numbers = #tpu.dot_dimension_numbers<[1], [0], [0], [1], [0, 0, 1, 1], [], []>} : vector<32x128xbf16>, vector<128x128xbf16>, vector<32x128xf32> -> vector<32x128xf32>
    %19 = arith.addf %14, %18 : vector<32x128xf32>
    %20 = vector.shape_cast %0 : vector<2x16x128xbf16> to vector<32x128xbf16>
    %c0_12 = arith.constant 0 : index
    %c0_13 = arith.constant 0 : index
    %21 = vector.load %arg7[%c0_12, %c0_13] : memref<128x128xbf16, #tpu.memory_space<vmem>>, vector<128x128xbf16>
    %cst_14 = arith.constant dense<0.000000e+00> : vector<32x128xf32>
    %22 = tpu.matmul %20, %21, %cst_14 {dimension_numbers = #tpu.dot_dimension_numbers<[1], [0], [0], [1], [0, 0, 1, 1], [], []>} : vector<32x128xbf16>, vector<128x128xbf16>, vector<32x128xf32> -> vector<32x128xf32>
    %c0_15 = arith.constant 0 : index
    %c0_16 = arith.constant 0 : index
    %23 = vector.load %arg8[%c0_15, %c0_16] : memref<1x128xf32, #tpu.memory_space<vmem>>, vector<1x128xf32>
    %24 = vector.broadcast %23 : vector<1x128xf32> to vector<32x128xf32>
    %25 = arith.addf %22, %24 : vector<32x128xf32>
    %c0_17 = arith.constant 0 : index
    %c0_18 = arith.constant 0 : index
    %26 = vector.load %arg2[%c0_17, %c0_18] : memref<1x128xf32, #tpu.memory_space<vmem>>, vector<1x128xf32>
    %c0_19 = arith.constant 0 : index
    %c0_20 = arith.constant 0 : index
    %27 = vector.load %arg3[%c0_19, %c0_20] : memref<1x128xf32, #tpu.memory_space<vmem>>, vector<1x128xf32>
    %cst_21 = arith.constant dense<0.000000e+00> : vector<128xf32>
    %28 = vector.multi_reduction <add>, %19, %cst_21 [0] : vector<32x128xf32> to vector<128xf32>
    %29 = vector.shape_cast %28 : vector<128xf32> to vector<1x128xf32>
    %cst_22 = arith.constant 3.125000e-02 : f32
    %30 = vector.broadcast %cst_22 : f32 to vector<1x128xf32>
    %31 = arith.mulf %29, %30 : vector<1x128xf32>
    %32 = arith.mulf %19, %19 : vector<32x128xf32>
    %cst_23 = arith.constant dense<0.000000e+00> : vector<128xf32>
    %33 = vector.multi_reduction <add>, %32, %cst_23 [0] : vector<32x128xf32> to vector<128xf32>
    %34 = vector.shape_cast %33 : vector<128xf32> to vector<1x128xf32>
    %cst_24 = arith.constant 3.125000e-02 : f32
    %35 = vector.broadcast %cst_24 : f32 to vector<1x128xf32>
    %36 = arith.mulf %34, %35 : vector<1x128xf32>
    %37 = arith.mulf %31, %31 : vector<1x128xf32>
    %38 = arith.subf %36, %37 : vector<1x128xf32>
    %cst_25 = arith.constant 0.000000e+00 : f32
    %39 = vector.broadcast %cst_25 : f32 to vector<1x128xf32>
    %40 = arith.maximumf %38, %39 : vector<1x128xf32>
    %cst_26 = arith.constant 9.99999974E-6 : f32
    %41 = vector.broadcast %cst_26 : f32 to vector<1x128xf32>
    %42 = arith.addf %40, %41 : vector<1x128xf32>
    %43 = math.rsqrt %42 : vector<1x128xf32>
    %44 = arith.mulf %26, %43 : vector<1x128xf32>
    %45 = vector.broadcast %44 : vector<1x128xf32> to vector<32x128xf32>
    %46 = arith.mulf %19, %45 : vector<32x128xf32>
    %47 = arith.mulf %31, %44 : vector<1x128xf32>
    %48 = arith.subf %27, %47 : vector<1x128xf32>
    %49 = vector.broadcast %48 : vector<1x128xf32> to vector<32x128xf32>
    %50 = arith.addf %46, %49 : vector<32x128xf32>
    %cst_27 = arith.constant 0.000000e+00 : f32
    %51 = vector.broadcast %cst_27 : f32 to vector<32x128xf32>
    %52 = arith.maximumf %50, %51 : vector<32x128xf32>
    %53 = arith.truncf %52 : vector<32x128xf32> to vector<32x128xbf16>
    %54 = vector.shape_cast %53 : vector<32x128xbf16> to vector<2x16x128xbf16>
    %cst_28 = arith.constant 0.000000e+00 : bf16
    %55 = vector.broadcast %cst_28 : bf16 to vector<2x1x128xbf16>
    %56 = vector.extract_strided_slice %54 {offsets = [0, 0, 0], sizes = [2, 15, 128], strides = [1, 1, 1]} : vector<2x16x128xbf16> to vector<2x15x128xbf16>
    %57 = tpu.concatenate %55, %56 in 1 : vector<2x1x128xbf16>, vector<2x15x128xbf16> -> vector<2x16x128xbf16>
    %58 = vector.extract_strided_slice %54 {offsets = [0, 1, 0], sizes = [2, 15, 128], strides = [1, 1, 1]} : vector<2x16x128xbf16> to vector<2x15x128xbf16>
    %59 = tpu.concatenate %58, %55 in 1 : vector<2x15x128xbf16>, vector<2x1x128xbf16> -> vector<2x16x128xbf16>
    %60 = vector.shape_cast %57 : vector<2x16x128xbf16> to vector<32x128xbf16>
    %c0_29 = arith.constant 0 : index
    %c0_30 = arith.constant 0 : index
    %c0_31 = arith.constant 0 : index
    %61 = vector.load %arg4[%c0_29, %c0_30, %c0_31] : memref<3x128x128xbf16, #tpu.memory_space<vmem>>, vector<1x128x128xbf16>
    %62 = vector.shape_cast %61 : vector<1x128x128xbf16> to vector<128x128xbf16>
    %cst_32 = arith.constant dense<0.000000e+00> : vector<32x128xf32>
    %63 = tpu.matmul %60, %62, %cst_32 {dimension_numbers = #tpu.dot_dimension_numbers<[1], [0], [0], [1], [0, 0, 1, 1], [], []>} : vector<32x128xbf16>, vector<128x128xbf16>, vector<32x128xf32> -> vector<32x128xf32>
    %64 = vector.shape_cast %54 : vector<2x16x128xbf16> to vector<32x128xbf16>
    %c1_33 = arith.constant 1 : index
    %c0_34 = arith.constant 0 : index
    %c0_35 = arith.constant 0 : index
    %65 = vector.load %arg4[%c1_33, %c0_34, %c0_35] : memref<3x128x128xbf16, #tpu.memory_space<vmem>>, vector<1x128x128xbf16>
    %66 = vector.shape_cast %65 : vector<1x128x128xbf16> to vector<128x128xbf16>
    %cst_36 = arith.constant dense<0.000000e+00> : vector<32x128xf32>
    %67 = tpu.matmul %64, %66, %cst_36 {dimension_numbers = #tpu.dot_dimension_numbers<[1], [0], [0], [1], [0, 0, 1, 1], [], []>} : vector<32x128xbf16>, vector<128x128xbf16>, vector<32x128xf32> -> vector<32x128xf32>
    %68 = arith.addf %63, %67 : vector<32x128xf32>
    %69 = vector.shape_cast %59 : vector<2x16x128xbf16> to vector<32x128xbf16>
    %c2_37 = arith.constant 2 : index
    %c0_38 = arith.constant 0 : index
    %c0_39 = arith.constant 0 : index
    %70 = vector.load %arg4[%c2_37, %c0_38, %c0_39] : memref<3x128x128xbf16, #tpu.memory_space<vmem>>, vector<1x128x128xbf16>
    %71 = vector.shape_cast %70 : vector<1x128x128xbf16> to vector<128x128xbf16>
    %cst_40 = arith.constant dense<0.000000e+00> : vector<32x128xf32>
    %72 = tpu.matmul %69, %71, %cst_40 {dimension_numbers = #tpu.dot_dimension_numbers<[1], [0], [0], [1], [0, 0, 1, 1], [], []>} : vector<32x128xbf16>, vector<128x128xbf16>, vector<32x128xf32> -> vector<32x128xf32>
    %73 = arith.addf %68, %72 : vector<32x128xf32>
    %c0_41 = arith.constant 0 : index
    %c0_42 = arith.constant 0 : index
    %74 = vector.load %arg5[%c0_41, %c0_42] : memref<1x128xf32, #tpu.memory_space<vmem>>, vector<1x128xf32>
    %c0_43 = arith.constant 0 : index
    %c0_44 = arith.constant 0 : index
    %75 = vector.load %arg6[%c0_43, %c0_44] : memref<1x128xf32, #tpu.memory_space<vmem>>, vector<1x128xf32>
    %cst_45 = arith.constant dense<0.000000e+00> : vector<128xf32>
    %76 = vector.multi_reduction <add>, %73, %cst_45 [0] : vector<32x128xf32> to vector<128xf32>
    %77 = vector.shape_cast %76 : vector<128xf32> to vector<1x128xf32>
    %cst_46 = arith.constant 3.125000e-02 : f32
    %78 = vector.broadcast %cst_46 : f32 to vector<1x128xf32>
    %79 = arith.mulf %77, %78 : vector<1x128xf32>
    %80 = arith.mulf %73, %73 : vector<32x128xf32>
    %cst_47 = arith.constant dense<0.000000e+00> : vector<128xf32>
    %81 = vector.multi_reduction <add>, %80, %cst_47 [0] : vector<32x128xf32> to vector<128xf32>
    %82 = vector.shape_cast %81 : vector<128xf32> to vector<1x128xf32>
    %cst_48 = arith.constant 3.125000e-02 : f32
    %83 = vector.broadcast %cst_48 : f32 to vector<1x128xf32>
    %84 = arith.mulf %82, %83 : vector<1x128xf32>
    %85 = arith.mulf %79, %79 : vector<1x128xf32>
    %86 = arith.subf %84, %85 : vector<1x128xf32>
    %cst_49 = arith.constant 0.000000e+00 : f32
    %87 = vector.broadcast %cst_49 : f32 to vector<1x128xf32>
    %88 = arith.maximumf %86, %87 : vector<1x128xf32>
    %cst_50 = arith.constant 9.99999974E-6 : f32
    %89 = vector.broadcast %cst_50 : f32 to vector<1x128xf32>
    %90 = arith.addf %88, %89 : vector<1x128xf32>
    %91 = math.rsqrt %90 : vector<1x128xf32>
    %92 = arith.mulf %74, %91 : vector<1x128xf32>
    %93 = vector.broadcast %92 : vector<1x128xf32> to vector<32x128xf32>
    %94 = arith.mulf %73, %93 : vector<32x128xf32>
    %95 = arith.mulf %79, %92 : vector<1x128xf32>
    %96 = arith.subf %75, %95 : vector<1x128xf32>
    %97 = vector.broadcast %96 : vector<1x128xf32> to vector<32x128xf32>
    %98 = arith.addf %94, %97 : vector<32x128xf32>
    %99 = arith.addf %98, %25 : vector<32x128xf32>
    %cst_51 = arith.constant 0.000000e+00 : f32
    %100 = vector.broadcast %cst_51 : f32 to vector<32x128xf32>
    %101 = arith.maximumf %99, %100 : vector<32x128xf32>
    %102 = vector.shape_cast %101 : vector<32x128xf32> to vector<2x16x128xf32>
    %c0_52 = arith.constant 0 : index
    %c0_53 = arith.constant 0 : index
    %c0_54 = arith.constant 0 : index
    %103 = vector.load %arg9[%c0_52, %c0_53, %c0_54] : memref<2x16x128xf32, #tpu.memory_space<vmem>>, vector<2x16x128xf32>
    tpu.vector_store %arg9[%c0_52, %c0_53, %c0_54], %102 {strides = array<i32>} : memref<2x16x128xf32, #tpu.memory_space<vmem>>, vector<2x16x128xf32>,
    return
  }
}

</mosaic_0001>

<llo_original>
// kernel: tpu_custom_call.1
$region0: #{tpu_custom_call.1}
  #allocation0 [shape = 'u32[]', space=smem, size = 0x4, offset = 0x4, fixed_abs, tag = 'smem constant byte address 0x4 - core index']
  #allocation1 [shape = 'u32[144,128]{1,0:T(1,128)}', space=vmem, size = 0x12000, scoped, tag = 'internal scratch']
  %s0 = inlined_call_operand.hbm [shape: bf16[2,16,128], index: 0, kind: input, shape index: {}]
  %s1 = inlined_call_operand.hbm [shape: bf16[3,128,128], index: 1, kind: input, shape index: {}]
  %s2 = inlined_call_operand.vmem [shape: f32[1,128], index: 2, kind: input, shape index: {}]
  %s3 = inlined_call_operand.vmem [shape: f32[1,128], index: 3, kind: input, shape index: {}]
  %s4 = inlined_call_operand.hbm [shape: bf16[3,128,128], index: 4, kind: input, shape index: {}]
  %s5 = inlined_call_operand.vmem [shape: f32[1,128], index: 5, kind: input, shape index: {}]
  %s6 = inlined_call_operand.vmem [shape: f32[1,128], index: 6, kind: input, shape index: {}]
  %s7 = inlined_call_operand.hbm [shape: bf16[128,128], index: 7, kind: input, shape index: {}]
  %s8 = inlined_call_operand.vmem [shape: f32[1,128], index: 8, kind: input, shape index: {}]
  %s9 = inlined_call_operand.hbm [shape: f32[2,16,128], index: 9, kind: output, shape index: {}]
  %s10 = sld [smem:[#allocation0]]
  $region62: #{tpu_custom_call.1} parent=0
    _
  %s12 = ssub.s32 1, %s10
  %s13 = scalar_select 0, %s12, %s10
  $region1: #{tpu_custom_call.1} parent=0
    #allocation2 [shape = 'u8[8192]{0}', space=vmem, size = 0x2000, scoped, tag = 'input window, operand 0, single buffered']
    #allocation3 [shape = 's32[1]{0}', space=sflag, size = 0x4, scoped, tag = 'scoped memory for tpu_custom_call.1']
    #allocation4 [shape = 's32[1]{0}', space=sflag, size = 0x4, scoped, tag = 'scoped memory for tpu_custom_call.1']
    #allocation5 [shape = 'u8[98304]{0}', space=vmem, size = 0x18000, scoped, tag = 'input window, operand 1, single buffered']
    #allocation6 [shape = 's32[1]{0}', space=sflag, size = 0x4, scoped, tag = 'scoped memory for tpu_custom_call.1']
    #allocation7 [shape = 'u8[98304]{0}', space=vmem, size = 0x18000, scoped, tag = 'input window, operand 4, single buffered']
    #allocation8 [shape = 'u8[32768]{0}', space=vmem, size = 0x8000, scoped, tag = 'input window, operand 7, single buffered']
    #allocation9 [shape = 's32[1]{0}', space=sflag, size = 0x4, scoped, tag = 'scoped memory for tpu_custom_call.1']
    #allocation10 [shape = 'u8[16384]{0}', space=vmem, size = 0x4000, scoped, tag = 'output window, operand 0, single buffered']
    %14 = vsyncpa [#allocation3], 0
    %15 = vsyncpa [#allocation6], 0
    %16 = vsyncpa [#allocation9], 0
    %17 = vsyncpa [#allocation4], 0
    // Predicated region
    $region2: #{tpu_custom_call.1} parent=1 // pred_check
      _
    $region3: #{tpu_custom_call.1} parent=1 // pred_check_branch
      %19 = sbr.rel (0) target = $region5
    $region4: #{tpu_custom_call.1} parent=1 // pred_region
      %s21 = ssub.s32 256, 256
      %22 = vsyncadd [#allocation3], %s21
      %s23 = sshll.u32 [#allocation2], 4
      %s24 = int_to_ptr.vmem [resolvable:$true] %s23
      %29 = dma.hbm_to_vmem [thread:$0]  %s0, 256, %s24, [#allocation3], 64, 64, 4
    $region5: #{tpu_custom_call.1} parent=1 // pred_fallthru
      _
    // Predicated region
    $region6: #{tpu_custom_call.1} parent=1 // pred_check
      _
    $region7: #{tpu_custom_call.1} parent=1 // pred_check_branch
      %31 = sbr.rel (0) target = $region9
    $region8: #{tpu_custom_call.1} parent=1 // pred_region
      %s33 = ssub.s32 3072, 3072
      %34 = vsyncadd [#allocation6], %s33
      %s35 = sshll.u32 [#allocation5], 4
      %s36 = int_to_ptr.vmem [resolvable:$true] %s35
      %41 = dma.hbm_to_vmem [thread:$0]  %s1, 3072, %s36, [#allocation6], 64, 64, 4
    $region9: #{tpu_custom_call.1} parent=1 // pred_fallthru
      _
    // Predicated region
    $region10: #{tpu_custom_call.1} parent=1 // pred_check
      _
    $region11: #{tpu_custom_call.1} parent=1 // pred_check_branch
      %43 = sbr.rel (0) target = $region13
    $region12: #{tpu_custom_call.1} parent=1 // pred_region
      _
    $region13: #{tpu_custom_call.1} parent=1 // pred_fallthru
      _
    // Predicated region
    $region14: #{tpu_custom_call.1} parent=1 // pred_check
      _
    $region15: #{tpu_custom_call.1} parent=1 // pred_check_branch
      %45 = sbr.rel (0) target = $region17
    $region16: #{tpu_custom_call.1} parent=1 // pred_region
      _
    $region17: #{tpu_custom_call.1} parent=1 // pred_fallthru
      _
    // Predicated region
    $region18: #{tpu_custom_call.1} parent=1 // pred_check
      _
    $region19: #{tpu_custom_call.1} parent=1 // pred_check_branch
      %47 = sbr.rel (0) target = $region21
    $region20: #{tpu_custom_call.1} parent=1 // pred_region
      %s49 = ssub.s32 3072, 3072
      %50 = vsyncadd [#allocation6], %s49
      %s51 = sshll.u32 [#allocation7], 4
      %s52 = int_to_ptr.vmem [resolvable:$true] %s51
      %57 = dma.hbm_to_vmem [thread:$0]  %s4, 3072, %s52, [#allocation6], 64, 64, 4
    $region21: #{tpu_custom_call.1} parent=1 // pred_fallthru
      _
    // Predicated region
    $region22: #{tpu_custom_call.1} parent=1 // pred_check
      _
    $region23: #{tpu_custom_call.1} parent=1 // pred_check_branch
      %59 = sbr.rel (0) target = $region25
    $region24: #{tpu_custom_call.1} parent=1 // pred_region
      _
    $region25: #{tpu_custom_call.1} parent=1 // pred_fallthru
      _
    // Predicated region
    $region26: #{tpu_custom_call.1} parent=1 // pred_check
      _
    $region27: #{tpu_custom_call.1} parent=1 // pred_check_branch
      %61 = sbr.rel (0) target = $region29
    $region28: #{tpu_custom_call.1} parent=1 // pred_region
      _
    $region29: #{tpu_custom_call.1} parent=1 // pred_fallthru
      _
    // Predicated region
    $region30: #{tpu_custom_call.1} parent=1 // pred_check
      _
    $region31: #{tpu_custom_call.1} parent=1 // pred_check_branch
      %63 = sbr.rel (0) target = $region33
    $region32: #{tpu_custom_call.1} parent=1 // pred_region
      %s65 = ssub.s32 1024, 1024
      %66 = vsyncadd [#allocation9], %s65
      %s67 = sshll.u32 [#allocation8], 4
      %s68 = int_to_ptr.vmem [resolvable:$true] %s67
      %73 = dma.hbm_to_vmem [thread:$0]  %s7, 1024, %s68, [#allocation9], 64, 64, 4
    $region33: #{tpu_custom_call.1} parent=1 // pred_fallthru
      _
    // Predicated region
    $region34: #{tpu_custom_call.1} parent=1 // pred_check
      _
    $region35: #{tpu_custom_call.1} parent=1 // pred_check_branch
      %75 = sbr.rel (0) target = $region37
    $region36: #{tpu_custom_call.1} parent=1 // pred_region
      _
    $region37: #{tpu_custom_call.1} parent=1 // pred_fallthru
      _
    // Predicated region
    $region38: #{tpu_custom_call.1} parent=1 // pred_check
      _
    $region39: #{tpu_custom_call.1} parent=1 // pred_check_branch
      %77 = sbr.rel (0) target = $region41
    $region40: #{tpu_custom_call.1} parent=1 // pred_region
      %78 = dma.done [#allocation3], 256
    $region41: #{tpu_custom_call.1} parent=1 // pred_fallthru
      _
    // Predicated region
    $region42: #{tpu_custom_call.1} parent=1 // pred_check
      _
    $region43: #{tpu_custom_call.1} parent=1 // pred_check_branch
      %80 = sbr.rel (0) target = $region45
    $region44: #{tpu_custom_call.1} parent=1 // pred_region
      %81 = dma.done [#allocation6], 3072
    $region45: #{tpu_custom_call.1} parent=1 // pred_fallthru
      _
    // Predicated region
    $region46: #{tpu_custom_call.1} parent=1 // pred_check
      _
    $region47: #{tpu_custom_call.1} parent=1 // pred_check_branch
      %83 = sbr.rel (0) target = $region49
    $region48: #{tpu_custom_call.1} parent=1 // pred_region
      %84 = dma.done [#allocation6], 3072
    $region49: #{tpu_custom_call.1} parent=1 // pred_fallthru
      _
    // Predicated region
    $region50: #{tpu_custom_call.1} parent=1 // pred_check
      _
    $region51: #{tpu_custom_call.1} parent=1 // pred_check_branch
      %86 = sbr.rel (0) target = $region53
    $region52: #{tpu_custom_call.1} parent=1 // pred_region
      %87 = dma.done [#allocation9], 1024
    $region53: #{tpu_custom_call.1} parent=1 // pred_fallthru
      _
    %v89 = vld [vmem:[#allocation2] sm:$0xf]
    %v90 = vld [vmem:[#allocation2 + $0x4] sm:$0xf]
    %v91 = vld [vmem:[#allocation2 + $0x8] sm:$0xf]
    %v92 = vld [vmem:[#allocation2 + $0xc] sm:$0xf]
    %v97 = vunpack.c.l.b16 %v89
    %v98 = vunpack.c.l.b16 %v90
    %v99 = vunpack.c.l.b16 %v91
    %v100 = vunpack.c.l.b16 %v92
    %v101 = vpack.c.b16 %v98, %v97
    %v102 = vpack.c.b16 %v100, %v99
    %v104 = vshrl.u32 %v101, 16
    %v106 = vrot.slane %v104, 7
    %v107 = vshll.u32 %v101, 16
    %v109 = vor.u32 %v106, %v107
    %v111 = vshrl.u32 %v102, 16
    %v113 = vrot.slane %v111, 7
    %v114 = vshll.u32 %v102, 16
    %v116 = vor.u32 %v113, %v114
    %vm119 = vcmask 1040384
    %vm120 = vsmask.f32 256
    %vm121 = vmand %vm119, %vm120
    %v122 = vsel %vm121, 0, %v109
    %v123 = vsel %vm121, 0, %v116
    %v124 = vrot.slane %v107, 1
    %v125 = vor.u32 %v104, %v124
    %v126 = vrot.slane %v114, 1
    %v127 = vor.u32 %v111, %v126
    %vm130 = vcmask 1047552
    %vm131 = vsmask.f32 7424
    %vm132 = vmand %vm130, %vm131
    %v133 = vsel %vm132, %v125, 0
    %v134 = vsel %vm132, %v127, 0
    %v135 = vld [vmem:[#allocation5] sm:$0xf]
    %v136 = vld [vmem:[#allocation5 + $0x4] sm:$0xf]
    %v137 = vld [vmem:[#allocation5 + $0x8] sm:$0xf]
    %v138 = vld [vmem:[#allocation5 + $0xc] sm:$0xf]
    %v139 = vld [vmem:[#allocation5 + $0x10] sm:$0xf]
    %v140 = vld [vmem:[#allocation5 + $0x14] sm:$0xf]
    %v141 = vld [vmem:[#allocation5 + $0x18] sm:$0xf]
    %v142 = vld [vmem:[#allocation5 + $0x1c] sm:$0xf]
    %v143 = vld [vmem:[#allocation5 + $0x20] sm:$0xf]
    %v144 = vld [vmem:[#allocation5 + $0x24] sm:$0xf]
    %v145 = vld [vmem:[#allocation5 + $0x28] sm:$0xf]
    %v146 = vld [vmem:[#allocation5 + $0x2c] sm:$0xf]
    %v147 = vld [vmem:[#allocation5 + $0x30] sm:$0xf]
    %v148 = vld [vmem:[#allocation5 + $0x34] sm:$0xf]
    %v149 = vld [vmem:[#allocation5 + $0x38] sm:$0xf]
    %v150 = vld [vmem:[#allocation5 + $0x3c] sm:$0xf]
    %s151 = scalar_lea.vmem [#allocation5], 64
    %v152 = vld [vmem:[%s151] sm:$0xf]
    %v153 = vld [vmem:[%s151 + $0x4] sm:$0xf]
    %v154 = vld [vmem:[%s151 + $0x8] sm:$0xf]
    %v155 = vld [vmem:[%s151 + $0xc] sm:$0xf]
    %v156 = vld [vmem:[%s151 + $0x10] sm:$0xf]
    %v157 = vld [vmem:[%s151 + $0x14] sm:$0xf]
    %v158 = vld [vmem:[%s151 + $0x18] sm:$0xf]
    %v159 = vld [vmem:[%s151 + $0x1c] sm:$0xf]
    %v160 = vld [vmem:[%s151 + $0x20] sm:$0xf]
    %v161 = vld [vmem:[%s151 + $0x24] sm:$0xf]
    %v162 = vld [vmem:[%s151 + $0x28] sm:$0xf]
    %v163 = vld [vmem:[%s151 + $0x2c] sm:$0xf]
    %v164 = vld [vmem:[%s151 + $0x30] sm:$0xf]
    %v165 = vld [vmem:[%s151 + $0x34] sm:$0xf]
    %v166 = vld [vmem:[%s151 + $0x38] sm:$0xf]
    %v167 = vld [vmem:[%s151 + $0x3c] sm:$0xf]
    %v186 = vunpack.c.l.b16 %v152
    %v187 = vunpack.c.l.b16 %v153
    %v188 = vunpack.c.l.b16 %v154
    %v189 = vunpack.c.l.b16 %v155
    %v190 = vunpack.c.l.b16 %v156
    %v191 = vunpack.c.l.b16 %v157
    %v192 = vunpack.c.l.b16 %v158
    %v193 = vunpack.c.l.b16 %v159
    %v194 = vunpack.c.l.b16 %v160
    %v195 = vunpack.c.l.b16 %v161
    %v196 = vunpack.c.l.b16 %v162
    %v197 = vunpack.c.l.b16 %v163
    %v198 = vunpack.c.l.b16 %v164
    %v199 = vunpack.c.l.b16 %v165
    %v200 = vunpack.c.l.b16 %v166
    %v201 = vunpack.c.l.b16 %v167
    %v202 = vpack.c.b16 %v187, %v186
    %v203 = vpack.c.b16 %v189, %v188
    %v204 = vpack.c.b16 %v191, %v190
    %v205 = vpack.c.b16 %v193, %v192
    %v206 = vpack.c.b16 %v195, %v194
    %v207 = vpack.c.b16 %v197, %v196
    %v208 = vpack.c.b16 %v199, %v198
    %v209 = vpack.c.b16 %v201, %v200
    %218 = vmatprep.subr.bf16.mxu0 0
    %219 = vmatpush1.bf16.msra.mxu0 %v209
    %220 = vmatprep.subr.bf16.mxu0 0
    %221 = vmatpush1.bf16.msra.mxu0 %v208
    %222 = vmatprep.subr.bf16.mxu0 0
    %223 = vmatpush1.bf16.msra.mxu0 %v207
    %224 = vmatprep.subr.bf16.mxu0 0
    %225 = vmatpush1.bf16.msra.mxu0 %v206
    %226 = vmatprep.subr.bf16.mxu0 0
    %227 = vmatpush1.bf16.msra.mxu0 %v205
    %228 = vmatprep.subr.bf16.mxu0 0
    %229 = vmatpush1.bf16.msra.mxu0 %v204
    %230 = vmatprep.subr.bf16.mxu0 0
    %231 = vmatpush1.bf16.msra.mxu0 %v203
    %232 = vmatprep.subr.bf16.mxu0 0
    %233 = vmatpush1.bf16.msra.mxu0 %v202
    %234 = vmatprep.subr.bf16.mxu0 0
    %235 = vmatpush2.bf16.msra.mxu0 0
    %236 = vmatprep.subr.bf16.mxu0 0
    %237 = vmatpush2.bf16.msra.mxu0 0
    %238 = vmatprep.subr.bf16.mxu0 0
    %239 = vmatpush2.bf16.msra.mxu0 0
    %240 = vmatprep.subr.bf16.mxu0 0
    %241 = vmatpush2.bf16.msra.mxu0 0
    %242 = vmatprep.subr.bf16.mxu0 0
    %243 = vmatpush2.bf16.msra.mxu0 0
    %244 = vmatprep.subr.bf16.mxu0 0
    %245 = vmatpush2.bf16.msra.mxu0 0
    %246 = vmatprep.subr.bf16.mxu0 0
    %247 = vmatpush2.bf16.msra.mxu0 0
    %248 = vmatprep.subr.bf16.mxu0 0
    %249 = vmatpush2.bf16.msra.mxu0 0
    %250 = vmatprep.mubr.bf16.mxu0 0
    %251 = vmatmul.mubr.bf16.gmra.mxu0 %v101
    %v252 = vpop.f32.mrf.mxu0
    %v253 = vadd.f32 0.0, %v252
    %v254 = vpop.f32.mrf.mxu0
    %v255 = vpop.f32.mrf.mxu0
    %v256 = vadd.f32 0.0, %v255
    %v257 = vpop.f32.mrf.mxu0
    %258 = vmatprep.mubr.bf16.mxu0 0
    %259 = vmatmul.mubr.bf16.gmra.mxu0 %v102
    %v260 = vpop.f32.mrf.mxu0
    %v261 = vadd.f32 0.0, %v260
    %v262 = vpop.f32.mrf.mxu0
    %v263 = vpop.f32.mrf.mxu0
    %v264 = vadd.f32 0.0, %v263
    %v265 = vpop.f32.mrf.mxu0
    %266 = vdwg.mxu0
    %v283 = vunpack.c.l.b16 %v135
    %v284 = vunpack.c.l.b16 %v136
    %v285 = vunpack.c.l.b16 %v137
    %v286 = vunpack.c.l.b16 %v138
    %v287 = vunpack.c.l.b16 %v139
    %v288 = vunpack.c.l.b16 %v140
    %v289 = vunpack.c.l.b16 %v141
    %v290 = vunpack.c.l.b16 %v142
    %v291 = vunpack.c.l.b16 %v143
    %v292 = vunpack.c.l.b16 %v144
    %v293 = vunpack.c.l.b16 %v145
    %v294 = vunpack.c.l.b16 %v146
    %v295 = vunpack.c.l.b16 %v147
    %v296 = vunpack.c.l.b16 %v148
    %v297 = vunpack.c.l.b16 %v149
    %v298 = vunpack.c.l.b16 %v150
    %v299 = vpack.c.b16 %v284, %v283
    %v300 = vpack.c.b16 %v286, %v285
    %v301 = vpack.c.b16 %v288, %v287
    %v302 = vpack.c.b16 %v290, %v289
    %v303 = vpack.c.b16 %v292, %v291
    %v304 = vpack.c.b16 %v294, %v293
    %v305 = vpack.c.b16 %v296, %v295
    %v306 = vpack.c.b16 %v298, %v297
    %315 = vmatprep.subr.bf16.mxu0 0
    %316 = vmatpush1.bf16.msra.mxu0 %v306
    %317 = vmatprep.subr.bf16.mxu0 0
    %318 = vmatpush1.bf16.msra.mxu0 %v305
    %319 = vmatprep.subr.bf16.mxu0 0
    %320 = vmatpush1.bf16.msra.mxu0 %v304
    %321 = vmatprep.subr.bf16.mxu0 0
    %322 = vmatpush1.bf16.msra.mxu0 %v303
    %323 = vmatprep.subr.bf16.mxu0 0
    %324 = vmatpush1.bf16.msra.mxu0 %v302
    %325 = vmatprep.subr.bf16.mxu0 0
    %326 = vmatpush1.bf16.msra.mxu0 %v301
    %327 = vmatprep.subr.bf16.mxu0 0
    %328 = vmatpush1.bf16.msra.mxu0 %v300
    %329 = vmatprep.subr.bf16.mxu0 0
    %330 = vmatpush1.bf16.msra.mxu0 %v299
    %331 = vmatprep.subr.bf16.mxu0 0
    %332 = vmatpush2.bf16.msra.mxu0 0
    %333 = vmatprep.subr.bf16.mxu0 0
    %334 = vmatpush2.bf16.msra.mxu0 0
    %335 = vmatprep.subr.bf16.mxu0 0
    %336 = vmatpush2.bf16.msra.mxu0 0
    %337 = vmatprep.subr.bf16.mxu0 0
    %338 = vmatpush2.bf16.msra.mxu0 0
    %339 = vmatprep.subr.bf16.mxu0 0
    %340 = vmatpush2.bf16.msra.mxu0 0
    %341 = vmatprep.subr.bf16.mxu0 0
    %342 = vmatpush2.bf16.msra.mxu0 0
    %343 = vmatprep.subr.bf16.mxu0 0
    %344 = vmatpush2.bf16.msra.mxu0 0
    %345 = vmatprep.subr.bf16.mxu0 0
    %346 = vmatpush2.bf16.msra.mxu0 0
    %347 = vmatprep.mubr.bf16.mxu0 0
    %348 = vmatmul.mubr.bf16.gmra.mxu0 %v122
    %v349 = vpop.f32.mrf.mxu0
    %v350 = vadd.f32 %v253, %v349
    %v351 = vpop.f32.mrf.mxu0
    %v352 = vpop.f32.mrf.mxu0
    %v353 = vadd.f32 %v256, %v352
    %v354 = vpop.f32.mrf.mxu0
    %355 = vmatprep.mubr.bf16.mxu0 0
    %356 = vmatmul.mubr.bf16.gmra.mxu0 %v123
    %v357 = vpop.f32.mrf.mxu0
    %v358 = vadd.f32 %v261, %v357
    %v359 = vpop.f32.mrf.mxu0
    %v360 = vpop.f32.mrf.mxu0
    %v361 = vadd.f32 %v264, %v360
    %v362 = vpop.f32.mrf.mxu0
    %363 = vdwg.mxu0
    %s364 = scalar_lea.vmem [#allocation5], 128
    %v365 = vld [vmem:[%s364] sm:$0xf]
    %v366 = vld [vmem:[%s364 + $0x4] sm:$0xf]
    %v367 = vld [vmem:[%s364 + $0x8] sm:$0xf]
    %v368 = vld [vmem:[%s364 + $0xc] sm:$0xf]
    %v369 = vld [vmem:[%s364 + $0x10] sm:$0xf]
    %v370 = vld [vmem:[%s364 + $0x14] sm:$0xf]
    %v371 = vld [vmem:[%s364 + $0x18] sm:$0xf]
    %v372 = vld [vmem:[%s364 + $0x1c] sm:$0xf]
    %v373 = vld [vmem:[%s364 + $0x20] sm:$0xf]
    %v374 = vld [vmem:[%s364 + $0x24] sm:$0xf]
    %v375 = vld [vmem:[%s364 + $0x28] sm:$0xf]
    %v376 = vld [vmem:[%s364 + $0x2c] sm:$0xf]
    %v377 = vld [vmem:[%s364 + $0x30] sm:$0xf]
    %v378 = vld [vmem:[%s364 + $0x34] sm:$0xf]
    %v379 = vld [vmem:[%s364 + $0x38] sm:$0xf]
    %v380 = vld [vmem:[%s364 + $0x3c] sm:$0xf]
    %v397 = vunpack.c.l.b16 %v365
    %v398 = vunpack.c.l.b16 %v366
    %v399 = vunpack.c.l.b16 %v367
    %v400 = vunpack.c.l.b16 %v368
    %v401 = vunpack.c.l.b16 %v369
    %v402 = vunpack.c.l.b16 %v370
    %v403 = vunpack.c.l.b16 %v371
    %v404 = vunpack.c.l.b16 %v372
    %v405 = vunpack.c.l.b16 %v373
    %v406 = vunpack.c.l.b16 %v374
    %v407 = vunpack.c.l.b16 %v375
    %v408 = vunpack.c.l.b16 %v376
    %v409 = vunpack.c.l.b16 %v377
    %v410 = vunpack.c.l.b16 %v378
    %v411 = vunpack.c.l.b16 %v379
    %v412 = vunpack.c.l.b16 %v380
    %v413 = vpack.c.b16 %v398, %v397
    %v414 = vpack.c.b16 %v400, %v399
    %v415 = vpack.c.b16 %v402, %v401
    %v416 = vpack.c.b16 %v404, %v403
    %v417 = vpack.c.b16 %v406, %v405
    %v418 = vpack.c.b16 %v408, %v407
    %v419 = vpack.c.b16 %v410, %v409
    %v420 = vpack.c.b16 %v412, %v411
    %429 = vmatprep.subr.bf16.mxu0 0
    %430 = vmatpush1.bf16.msra.mxu0 %v420
    %431 = vmatprep.subr.bf16.mxu0 0
    %432 = vmatpush1.bf16.msra.mxu0 %v419
    %433 = vmatprep.subr.bf16.mxu0 0
    %434 = vmatpush1.bf16.msra.mxu0 %v418
    %435 = vmatprep.subr.bf16.mxu0 0
    %436 = vmatpush1.bf16.msra.mxu0 %v417
    %437 = vmatprep.subr.bf16.mxu0 0
    %438 = vmatpush1.bf16.msra.mxu0 %v416
    %439 = vmatprep.subr.bf16.mxu0 0
    %440 = vmatpush1.bf16.msra.mxu0 %v415
    %441 = vmatprep.subr.bf16.mxu0 0
    %442 = vmatpush1.bf16.msra.mxu0 %v414
    %443 = vmatprep.subr.bf16.mxu0 0
    %444 = vmatpush1.bf16.msra.mxu0 %v413
    %445 = vmatprep.subr.bf16.mxu0 0
    %446 = vmatpush2.bf16.msra.mxu0 0
    %447 = vmatprep.subr.bf16.mxu0 0
    %448 = vmatpush2.bf16.msra.mxu0 0
    %449 = vmatprep.subr.bf16.mxu0 0
    %450 = vmatpush2.bf16.msra.mxu0 0
    %451 = vmatprep.subr.bf16.mxu0 0
    %452 = vmatpush2.bf16.msra.mxu0 0
    %453 = vmatprep.subr.bf16.mxu0 0
    %454 = vmatpush2.bf16.msra.mxu0 0
    %455 = vmatprep.subr.bf16.mxu0 0
    %456 = vmatpush2.bf16.msra.mxu0 0
    %457 = vmatprep.subr.bf16.mxu0 0
    %458 = vmatpush2.bf16.msra.mxu0 0
    %459 = vmatprep.subr.bf16.mxu0 0
    %460 = vmatpush2.bf16.msra.mxu0 0
    %461 = vmatprep.mubr.bf16.mxu0 0
    %462 = vmatmul.mubr.bf16.gmra.mxu0 %v133
    %v463 = vpop.f32.mrf.mxu0
    %v464 = vadd.f32 0.0, %v463
    %v465 = vpop.f32.mrf.mxu0
    %v466 = vpop.f32.mrf.mxu0
    %v467 = vadd.f32 0.0, %v466
    %v468 = vpop.f32.mrf.mxu0
    %469 = vmatprep.mubr.bf16.mxu0 0
    %470 = vmatmul.mubr.bf16.gmra.mxu0 %v134
    %v471 = vpop.f32.mrf.mxu0
    %v472 = vadd.f32 0.0, %v471
    %v473 = vpop.f32.mrf.mxu0
    %v474 = vpop.f32.mrf.mxu0
    %v475 = vadd.f32 0.0, %v474
    %v476 = vpop.f32.mrf.mxu0
    %477 = vdwg.mxu0
    %v478 = vadd.f32 %v350, %v464
    %v479 = vadd.f32 %v353, %v467
    %v480 = vadd.f32 %v358, %v472
    %v481 = vadd.f32 %v361, %v475
    %v482 = vld [vmem:[#allocation8] sm:$0xf]
    %v483 = vld [vmem:[#allocation8 + $0x4] sm:$0xf]
    %v484 = vld [vmem:[#allocation8 + $0x8] sm:$0xf]
    %v485 = vld [vmem:[#allocation8 + $0xc] sm:$0xf]
    %v486 = vld [vmem:[#allocation8 + $0x10] sm:$0xf]
    %v487 = vld [vmem:[#allocation8 + $0x14] sm:$0xf]
    %v488 = vld [vmem:[#allocation8 + $0x18] sm:$0xf]
    %v489 = vld [vmem:[#allocation8 + $0x1c] sm:$0xf]
    %v490 = vld [vmem:[#allocation8 + $0x20] sm:$0xf]
    %v491 = vld [vmem:[#allocation8 + $0x24] sm:$0xf]
    %v492 = vld [vmem:[#allocation8 + $0x28] sm:$0xf]
    %v493 = vld [vmem:[#allocation8 + $0x2c] sm:$0xf]
    %v494 = vld [vmem:[#allocation8 + $0x30] sm:$0xf]
    %v495 = vld [vmem:[#allocation8 + $0x34] sm:$0xf]
    %v496 = vld [vmem:[#allocation8 + $0x38] sm:$0xf]
    %v497 = vld [vmem:[#allocation8 + $0x3c] sm:$0xf]
    %v498 = vld [vmem:[%s8] sm:$0x1]
    %v500 = vlaneseq
    %v501 = vshrl.u32 %v500, 7
    %v502 = vsub.s32 0, %v501
    %v503 = vrot.slane %v498, %v502
    %v521 = vunpack.c.l.b16 %v482
    %v522 = vunpack.c.l.b16 %v483
    %v523 = vunpack.c.l.b16 %v484
    %v524 = vunpack.c.l.b16 %v485
    %v525 = vunpack.c.l.b16 %v486
    %v526 = vunpack.c.l.b16 %v487
    %v527 = vunpack.c.l.b16 %v488
    %v528 = vunpack.c.l.b16 %v489
    %v529 = vunpack.c.l.b16 %v490
    %v530 = vunpack.c.l.b16 %v491
    %v531 = vunpack.c.l.b16 %v492
    %v532 = vunpack.c.l.b16 %v493
    %v533 = vunpack.c.l.b16 %v494
    %v534 = vunpack.c.l.b16 %v495
    %v535 = vunpack.c.l.b16 %v496
    %v536 = vunpack.c.l.b16 %v497
    %v537 = vpack.c.b16 %v522, %v521
    %v538 = vpack.c.b16 %v524, %v523
    %v539 = vpack.c.b16 %v526, %v525
    %v540 = vpack.c.b16 %v528, %v527
    %v541 = vpack.c.b16 %v530, %v529
    %v542 = vpack.c.b16 %v532, %v531
    %v543 = vpack.c.b16 %v534, %v533
    %v544 = vpack.c.b16 %v536, %v535
    %553 = vmatprep.subr.bf16.mxu0 0
    %554 = vmatpush1.bf16.msra.mxu0 %v544
    %555 = vmatprep.subr.bf16.mxu0 0
    %556 = vmatpush1.bf16.msra.mxu0 %v543
    %557 = vmatprep.subr.bf16.mxu0 0
    %558 = vmatpush1.bf16.msra.mxu0 %v542
    %559 = vmatprep.subr.bf16.mxu0 0
    %560 = vmatpush1.bf16.msra.mxu0 %v541
    %561 = vmatprep.subr.bf16.mxu0 0
    %562 = vmatpush1.bf16.msra.mxu0 %v540
    %563 = vmatprep.subr.bf16.mxu0 0
    %564 = vmatpush1.bf16.msra.mxu0 %v539
    %565 = vmatprep.subr.bf16.mxu0 0
    %566 = vmatpush1.bf16.msra.mxu0 %v538
    %567 = vmatprep.subr.bf16.mxu0 0
    %568 = vmatpush1.bf16.msra.mxu0 %v537
    %569 = vmatprep.subr.bf16.mxu0 0
    %570 = vmatpush2.bf16.msra.mxu0 0
    %571 = vmatprep.subr.bf16.mxu0 0
    %572 = vmatpush2.bf16.msra.mxu0 0
    %573 = vmatprep.subr.bf16.mxu0 0
    %574 = vmatpush2.bf16.msra.mxu0 0
    %575 = vmatprep.subr.bf16.mxu0 0
    %576 = vmatpush2.bf16.msra.mxu0 0
    %577 = vmatprep.subr.bf16.mxu0 0
    %578 = vmatpush2.bf16.msra.mxu0 0
    %579 = vmatprep.subr.bf16.mxu0 0
    %580 = vmatpush2.bf16.msra.mxu0 0
    %581 = vmatprep.subr.bf16.mxu0 0
    %582 = vmatpush2.bf16.msra.mxu0 0
    %583 = vmatprep.subr.bf16.mxu0 0
    %584 = vmatpush2.bf16.msra.mxu0 0
    %585 = vmatprep.mubr.bf16.mxu0 0
    %586 = vmatmul.mubr.bf16.gmra.mxu0 %v101
    %v587 = vpop.f32.mrf.mxu0
    %v588 = vadd.f32 %v503, %v587
    %v589 = vpop.f32.mrf.mxu0
    %v590 = vpop.f32.mrf.mxu0
    %v591 = vadd.f32 %v503, %v590
    %v592 = vpop.f32.mrf.mxu0
    %593 = vmatprep.mubr.bf16.mxu0 0
    %594 = vmatmul.mubr.bf16.gmra.mxu0 %v102
    %v595 = vpop.f32.mrf.mxu0
    %v596 = vadd.f32 %v503, %v595
    %v597 = vpop.f32.mrf.mxu0
    %v598 = vpop.f32.mrf.mxu0
    %v599 = vadd.f32 %v503, %v598
    %v600 = vpop.f32.mrf.mxu0
    %601 = vdwg.mxu0
    %v602 = vld [vmem:[%s2] sm:$0x1]
    %v603 = vld [vmem:[%s3] sm:$0x1]
    %v604 = vadd.f32 %v478, %v479
    %v605 = vadd.f32 %v604, %v480
    %v606 = vadd.f32 %v605, %v481
    %v607 = vrot.slane %v606, 4
    %v608 = vadd.f32 %v606, %v607
    %v609 = vrot.slane %v608, 2
    %v610 = vadd.f32 %v608, %v609
    %v611 = vrot.slane %v610, 1
    %v612 = vadd.f32 %v610, %v611
    %v613 = vmul.f32 %v612, 0.03125
    %v614 = vmul.f32 %v478, %v478
    %v615 = vmul.f32 %v479, %v479
    %v616 = vmul.f32 %v480, %v480
    %v617 = vmul.f32 %v481, %v481
    %v618 = vadd.f32 %v614, %v615
    %v619 = vadd.f32 %v618, %v616
    %v620 = vadd.f32 %v619, %v617
    %v621 = vrot.slane %v620, 4
    %v622 = vadd.f32 %v620, %v621
    %v623 = vrot.slane %v622, 2
    %v624 = vadd.f32 %v622, %v623
    %v625 = vrot.slane %v624, 1
    %v626 = vadd.f32 %v624, %v625
    %v627 = vmul.f32 %v626, 0.03125
    %v628 = vmul.f32 %v613, %v613
    %v629 = vsub.f32 %v627, %v628
    %v630 = vmax.f32 %v629, 0.0
    %v631 = vadd.f32 %v630, 1e-05
    %v632 = vrsqrt.pop %v631
    %v633 = vmul.f32 %v602, %v632
    %v635 = vlaneseq
    %v636 = vshrl.u32 %v635, 7
    %v637 = vsub.s32 0, %v636
    %v638 = vrot.slane %v633, %v637
    %v640 = vmul.f32 %v478, %v638
    %v641 = vmul.f32 %v479, %v638
    %v642 = vmul.f32 %v480, %v638
    %v643 = vmul.f32 %v481, %v638
    %v644 = vmul.f32 %v613, %v633
    %v645 = vsub.f32 %v603, %v644
    %v647 = vlaneseq
    %v648 = vshrl.u32 %v647, 7
    %v649 = vsub.s32 0, %v648
    %v650 = vrot.slane %v645, %v649
    %v652 = vadd.f32 %v640, %v650
    %v653 = vadd.f32 %v641, %v650
    %v654 = vadd.f32 %v642, %v650
    %v655 = vadd.f32 %v643, %v650
    %v656 = vmax.f32 %v652, 0.0
    %v657 = vmax.f32 %v653, 0.0
    %v658 = vmax.f32 %v654, 0.0
    %v659 = vmax.f32 %v655, 0.0
    %v660 = vpack.c.bf16 %v657, %v656
    %v661 = vpack.c.bf16 %v659, %v658
    %v663 = vshrl.u32 %v660, 16
    %v665 = vrot.slane %v663, 7
    %v666 = vshll.u32 %v660, 16
    %v668 = vor.u32 %v665, %v666
    %v670 = vshrl.u32 %v661, 16
    %v672 = vrot.slane %v670, 7
    %v673 = vshll.u32 %v661, 16
    %v675 = vor.u32 %v672, %v673
    %v678 = vsel %vm121, 0, %v668
    %v679 = vsel %vm121, 0, %v675
    %v680 = vrot.slane %v666, 1
    %v681 = vor.u32 %v663, %v680
    %v682 = vrot.slane %v673, 1
    %v683 = vor.u32 %v670, %v682
    %v686 = vsel %vm132, %v681, 0
    %v687 = vsel %vm132, %v683, 0
    %v688 = vld [vmem:[#allocation7] sm:$0xf]
    %v689 = vld [vmem:[#allocation7 + $0x4] sm:$0xf]
    %v690 = vld [vmem:[#allocation7 + $0x8] sm:$0xf]
    %v691 = vld [vmem:[#allocation7 + $0xc] sm:$0xf]
    %v692 = vld [vmem:[#allocation7 + $0x10] sm:$0xf]
    %v693 = vld [vmem:[#allocation7 + $0x14] sm:$0xf]
    %v694 = vld [vmem:[#allocation7 + $0x18] sm:$0xf]
    %v695 = vld [vmem:[#allocation7 + $0x1c] sm:$0xf]
    %v696 = vld [vmem:[#allocation7 + $0x20] sm:$0xf]
    %v697 = vld [vmem:[#allocation7 + $0x24] sm:$0xf]
    %v698 = vld [vmem:[#allocation7 + $0x28] sm:$0xf]
    %v699 = vld [vmem:[#allocation7 + $0x2c] sm:$0xf]
    %v700 = vld [vmem:[#allocation7 + $0x30] sm:$0xf]
    %v701 = vld [vmem:[#allocation7 + $0x34] sm:$0xf]
    %v702 = vld [vmem:[#allocation7 + $0x38] sm:$0xf]
    %v703 = vld [vmem:[#allocation7 + $0x3c] sm:$0xf]
    %s704 = scalar_lea.vmem [#allocation7], 64
    %v705 = vld [vmem:[%s704] sm:$0xf]
    %v706 = vld [vmem:[%s704 + $0x4] sm:$0xf]
    %v707 = vld [vmem:[%s704 + $0x8] sm:$0xf]
    %v708 = vld [vmem:[%s704 + $0xc] sm:$0xf]
    %v709 = vld [vmem:[%s704 + $0x10] sm:$0xf]
    %v710 = vld [vmem:[%s704 + $0x14] sm:$0xf]
    %v711 = vld [vmem:[%s704 + $0x18] sm:$0xf]
    %v712 = vld [vmem:[%s704 + $0x1c] sm:$0xf]
    %v713 = vld [vmem:[%s704 + $0x20] sm:$0xf]
    %v714 = vld [vmem:[%s704 + $0x24] sm:$0xf]
    %v715 = vld [vmem:[%s704 + $0x28] sm:$0xf]
    %v716 = vld [vmem:[%s704 + $0x2c] sm:$0xf]
    %v717 = vld [vmem:[%s704 + $0x30] sm:$0xf]
    %v718 = vld [vmem:[%s704 + $0x34] sm:$0xf]
    %v719 = vld [vmem:[%s704 + $0x38] sm:$0xf]
    %v720 = vld [vmem:[%s704 + $0x3c] sm:$0xf]
    %v737 = vunpack.c.l.b16 %v705
    %v738 = vunpack.c.l.b16 %v706
    %v739 = vunpack.c.l.b16 %v707
    %v740 = vunpack.c.l.b16 %v708
    %v741 = vunpack.c.l.b16 %v709
    %v742 = vunpack.c.l.b16 %v710
    %v743 = vunpack.c.l.b16 %v711
    %v744 = vunpack.c.l.b16 %v712
    %v745 = vunpack.c.l.b16 %v713
    %v746 = vunpack.c.l.b16 %v714
    %v747 = vunpack.c.l.b16 %v715
    %v748 = vunpack.c.l.b16 %v716
    %v749 = vunpack.c.l.b16 %v717
    %v750 = vunpack.c.l.b16 %v718
    %v751 = vunpack.c.l.b16 %v719
    %v752 = vunpack.c.l.b16 %v720
    %v753 = vpack.c.b16 %v738, %v737
    %v754 = vpack.c.b16 %v740, %v739
    %v755 = vpack.c.b16 %v742, %v741
    %v756 = vpack.c.b16 %v744, %v743
    %v757 = vpack.c.b16 %v746, %v745
    %v758 = vpack.c.b16 %v748, %v747
    %v759 = vpack.c.b16 %v750, %v749
    %v760 = vpack.c.b16 %v752, %v751
    %769 = vmatprep.subr.bf16.mxu0 0
    %770 = vmatpush1.bf16.msra.mxu0 %v760
    %771 = vmatprep.subr.bf16.mxu0 0
    %772 = vmatpush1.bf16.msra.mxu0 %v759
    %773 = vmatprep.subr.bf16.mxu0 0
    %774 = vmatpush1.bf16.msra.mxu0 %v758
    %775 = vmatprep.subr.bf16.mxu0 0
    %776 = vmatpush1.bf16.msra.mxu0 %v757
    %777 = vmatprep.subr.bf16.mxu0 0
    %778 = vmatpush1.bf16.msra.mxu0 %v756
    %779 = vmatprep.subr.bf16.mxu0 0
    %780 = vmatpush1.bf16.msra.mxu0 %v755
    %781 = vmatprep.subr.bf16.mxu0 0
    %782 = vmatpush1.bf16.msra.mxu0 %v754
    %783 = vmatprep.subr.bf16.mxu0 0
    %784 = vmatpush1.bf16.msra.mxu0 %v753
    %785 = vmatprep.subr.bf16.mxu0 0
    %786 = vmatpush2.bf16.msra.mxu0 0
    %787 = vmatprep.subr.bf16.mxu0 0
    %788 = vmatpush2.bf16.msra.mxu0 0
    %789 = vmatprep.subr.bf16.mxu0 0
    %790 = vmatpush2.bf16.msra.mxu0 0
    %791 = vmatprep.subr.bf16.mxu0 0
    %792 = vmatpush2.bf16.msra.mxu0 0
    %793 = vmatprep.subr.bf16.mxu0 0
    %794 = vmatpush2.bf16.msra.mxu0 0
    %795 = vmatprep.subr.bf16.mxu0 0
    %796 = vmatpush2.bf16.msra.mxu0 0
    %797 = vmatprep.subr.bf16.mxu0 0
    %798 = vmatpush2.bf16.msra.mxu0 0
    %799 = vmatprep.subr.bf16.mxu0 0
    %800 = vmatpush2.bf16.msra.mxu0 0
    %801 = vmatprep.mubr.bf16.mxu0 0
    %802 = vmatmul.mubr.bf16.gmra.mxu0 %v660
    %v803 = vpop.f32.mrf.mxu0
    %v804 = vadd.f32 0.0, %v803
    %v805 = vpop.f32.mrf.mxu0
    %v806 = vpop.f32.mrf.mxu0
    %v807 = vadd.f32 0.0, %v806
    %v808 = vpop.f32.mrf.mxu0
    %809 = vmatprep.mubr.bf16.mxu0 0
    %810 = vmatmul.mubr.bf16.gmra.mxu0 %v661
    %v811 = vpop.f32.mrf.mxu0
    %v812 = vadd.f32 0.0, %v811
    %v813 = vpop.f32.mrf.mxu0
    %v814 = vpop.f32.mrf.mxu0
    %v815 = vadd.f32 0.0, %v814
    %v816 = vpop.f32.mrf.mxu0
    %817 = vdwg.mxu0
    %v834 = vunpack.c.l.b16 %v688
    %v835 = vunpack.c.l.b16 %v689
    %v836 = vunpack.c.l.b16 %v690
    %v837 = vunpack.c.l.b16 %v691
    %v838 = vunpack.c.l.b16 %v692
    %v839 = vunpack.c.l.b16 %v693
    %v840 = vunpack.c.l.b16 %v694
    %v841 = vunpack.c.l.b16 %v695
    %v842 = vunpack.c.l.b16 %v696
    %v843 = vunpack.c.l.b16 %v697
    %v844 = vunpack.c.l.b16 %v698
    %v845 = vunpack.c.l.b16 %v699
    %v846 = vunpack.c.l.b16 %v700
    %v847 = vunpack.c.l.b16 %v701
    %v848 = vunpack.c.l.b16 %v702
    %v849 = vunpack.c.l.b16 %v703
    %v850 = vpack.c.b16 %v835, %v834
    %v851 = vpack.c.b16 %v837, %v836
    %v852 = vpack.c.b16 %v839, %v838
    %v853 = vpack.c.b16 %v841, %v840
    %v854 = vpack.c.b16 %v843, %v842
    %v855 = vpack.c.b16 %v845, %v844
    %v856 = vpack.c.b16 %v847, %v846
    %v857 = vpack.c.b16 %v849, %v848
    %866 = vmatprep.subr.bf16.mxu0 0
    %867 = vmatpush1.bf16.msra.mxu0 %v857
    %868 = vmatprep.subr.bf16.mxu0 0
    %869 = vmatpush1.bf16.msra.mxu0 %v856
    %870 = vmatprep.subr.bf16.mxu0 0
    %871 = vmatpush1.bf16.msra.mxu0 %v855
    %872 = vmatprep.subr.bf16.mxu0 0
    %873 = vmatpush1.bf16.msra.mxu0 %v854
    %874 = vmatprep.subr.bf16.mxu0 0
    %875 = vmatpush1.bf16.msra.mxu0 %v853
    %876 = vmatprep.subr.bf16.mxu0 0
    %877 = vmatpush1.bf16.msra.mxu0 %v852
    %878 = vmatprep.subr.bf16.mxu0 0
    %879 = vmatpush1.bf16.msra.mxu0 %v851
    %880 = vmatprep.subr.bf16.mxu0 0
    %881 = vmatpush1.bf16.msra.mxu0 %v850
    %882 = vmatprep.subr.bf16.mxu0 0
    %883 = vmatpush2.bf16.msra.mxu0 0
    %884 = vmatprep.subr.bf16.mxu0 0
    %885 = vmatpush2.bf16.msra.mxu0 0
    %886 = vmatprep.subr.bf16.mxu0 0
    %887 = vmatpush2.bf16.msra.mxu0 0
    %888 = vmatprep.subr.bf16.mxu0 0
    %889 = vmatpush2.bf16.msra.mxu0 0
    %890 = vmatprep.subr.bf16.mxu0 0
    %891 = vmatpush2.bf16.msra.mxu0 0
    %892 = vmatprep.subr.bf16.mxu0 0
    %893 = vmatpush2.bf16.msra.mxu0 0
    %894 = vmatprep.subr.bf16.mxu0 0
    %895 = vmatpush2.bf16.msra.mxu0 0
    %896 = vmatprep.subr.bf16.mxu0 0
    %897 = vmatpush2.bf16.msra.mxu0 0
    %898 = vmatprep.mubr.bf16.mxu0 0
    %899 = vmatmul.mubr.bf16.gmra.mxu0 %v678
    %v900 = vpop.f32.mrf.mxu0
    %v901 = vadd.f32 %v804, %v900
    %v902 = vpop.f32.mrf.mxu0
    %v903 = vpop.f32.mrf.mxu0
    %v904 = vadd.f32 %v807, %v903
    %v905 = vpop.f32.mrf.mxu0
    %906 = vmatprep.mubr.bf16.mxu0 0
    %907 = vmatmul.mubr.bf16.gmra.mxu0 %v679
    %v908 = vpop.f32.mrf.mxu0
    %v909 = vadd.f32 %v812, %v908
    %v910 = vpop.f32.mrf.mxu0
    %v911 = vpop.f32.mrf.mxu0
    %v912 = vadd.f32 %v815, %v911
    %v913 = vpop.f32.mrf.mxu0
    %914 = vdwg.mxu0
    %s915 = scalar_lea.vmem [#allocation7], 128
    %v916 = vld [vmem:[%s915] sm:$0xf]
    %v917 = vld [vmem:[%s915 + $0x4] sm:$0xf]
    %v918 = vld [vmem:[%s915 + $0x8] sm:$0xf]
    %v919 = vld [vmem:[%s915 + $0xc] sm:$0xf]
    %v920 = vld [vmem:[%s915 + $0x10] sm:$0xf]
    %v921 = vld [vmem:[%s915 + $0x14] sm:$0xf]
    %v922 = vld [vmem:[%s915 + $0x18] sm:$0xf]
    %v923 = vld [vmem:[%s915 + $0x1c] sm:$0xf]
    %v924 = vld [vmem:[%s915 + $0x20] sm:$0xf]
    %v925 = vld [vmem:[%s915 + $0x24] sm:$0xf]
    %v926 = vld [vmem:[%s915 + $0x28] sm:$0xf]
    %v927 = vld [vmem:[%s915 + $0x2c] sm:$0xf]
    %v928 = vld [vmem:[%s915 + $0x30] sm:$0xf]
    %v929 = vld [vmem:[%s915 + $0x34] sm:$0xf]
    %v930 = vld [vmem:[%s915 + $0x38] sm:$0xf]
    %v931 = vld [vmem:[%s915 + $0x3c] sm:$0xf]
    %v948 = vunpack.c.l.b16 %v916
    %v949 = vunpack.c.l.b16 %v917
    %v950 = vunpack.c.l.b16 %v918
    %v951 = vunpack.c.l.b16 %v919
    %v952 = vunpack.c.l.b16 %v920
    %v953 = vunpack.c.l.b16 %v921
    %v954 = vunpack.c.l.b16 %v922
    %v955 = vunpack.c.l.b16 %v923
    %v956 = vunpack.c.l.b16 %v924
    %v957 = vunpack.c.l.b16 %v925
    %v958 = vunpack.c.l.b16 %v926
    %v959 = vunpack.c.l.b16 %v927
    %v960 = vunpack.c.l.b16 %v928
    %v961 = vunpack.c.l.b16 %v929
    %v962 = vunpack.c.l.b16 %v930
    %v963 = vunpack.c.l.b16 %v931
    %v964 = vpack.c.b16 %v949, %v948
    %v965 = vpack.c.b16 %v951, %v950
    %v966 = vpack.c.b16 %v953, %v952
    %v967 = vpack.c.b16 %v955, %v954
    %v968 = vpack.c.b16 %v957, %v956
    %v969 = vpack.c.b16 %v959, %v958
    %v970 = vpack.c.b16 %v961, %v960
    %v971 = vpack.c.b16 %v963, %v962
    %980 = vmatprep.subr.bf16.mxu0 0
    %981 = vmatpush1.bf16.msra.mxu0 %v971
    %982 = vmatprep.subr.bf16.mxu0 0
    %983 = vmatpush1.bf16.msra.mxu0 %v970
    %984 = vmatprep.subr.bf16.mxu0 0
    %985 = vmatpush1.bf16.msra.mxu0 %v969
    %986 = vmatprep.subr.bf16.mxu0 0
    %987 = vmatpush1.bf16.msra.mxu0 %v968
    %988 = vmatprep.subr.bf16.mxu0 0
    %989 = vmatpush1.bf16.msra.mxu0 %v967
    %990 = vmatprep.subr.bf16.mxu0 0
    %991 = vmatpush1.bf16.msra.mxu0 %v966
    %992 = vmatprep.subr.bf16.mxu0 0
    %993 = vmatpush1.bf16.msra.mxu0 %v965
    %994 = vmatprep.subr.bf16.mxu0 0
    %995 = vmatpush1.bf16.msra.mxu0 %v964
    %996 = vmatprep.subr.bf16.mxu0 0
    %997 = vmatpush2.bf16.msra.mxu0 0
    %998 = vmatprep.subr.bf16.mxu0 0
    %999 = vmatpush2.bf16.msra.mxu0 0
    %1000 = vmatprep.subr.bf16.mxu0 0
    %1001 = vmatpush2.bf16.msra.mxu0 0
    %1002 = vmatprep.subr.bf16.mxu0 0
    %1003 = vmatpush2.bf16.msra.mxu0 0
    %1004 = vmatprep.subr.bf16.mxu0 0
    %1005 = vmatpush2.bf16.msra.mxu0 0
    %1006 = vmatprep.subr.bf16.mxu0 0
    %1007 = vmatpush2.bf16.msra.mxu0 0
    %1008 = vmatprep.subr.bf16.mxu0 0
    %1009 = vmatpush2.bf16.msra.mxu0 0
    %1010 = vmatprep.subr.bf16.mxu0 0
    %1011 = vmatpush2.bf16.msra.mxu0 0
    %1012 = vmatprep.mubr.bf16.mxu0 0
    %1013 = vmatmul.mubr.bf16.gmra.mxu0 %v686
    %v1014 = vpop.f32.mrf.mxu0
    %v1015 = vadd.f32 0.0, %v1014
    %v1016 = vpop.f32.mrf.mxu0
    %v1017 = vpop.f32.mrf.mxu0
    %v1018 = vadd.f32 0.0, %v1017
    %v1019 = vpop.f32.mrf.mxu0
    %1020 = vmatprep.mubr.bf16.mxu0 0
    %1021 = vmatmul.mubr.bf16.gmra.mxu0 %v687
    %v1022 = vpop.f32.mrf.mxu0
    %v1023 = vadd.f32 0.0, %v1022
    %v1024 = vpop.f32.mrf.mxu0
    %v1025 = vpop.f32.mrf.mxu0
    %v1026 = vadd.f32 0.0, %v1025
    %v1027 = vpop.f32.mrf.mxu0
    %1028 = vdwg.mxu0
    %v1029 = vadd.f32 %v901, %v1015
    %v1030 = vadd.f32 %v904, %v1018
    %v1031 = vadd.f32 %v909, %v1023
    %v1032 = vadd.f32 %v912, %v1026
    %v1033 = vld [vmem:[%s5] sm:$0x1]
    %v1034 = vld [vmem:[%s6] sm:$0x1]
    %v1035 = vadd.f32 %v1029, %v1030
    %v1036 = vadd.f32 %v1035, %v1031
    %v1037 = vadd.f32 %v1036, %v1032
    %v1038 = vrot.slane %v1037, 4
    %v1039 = vadd.f32 %v1037, %v1038
    %v1040 = vrot.slane %v1039, 2
    %v1041 = vadd.f32 %v1039, %v1040
    %v1042 = vrot.slane %v1041, 1
    %v1043 = vadd.f32 %v1041, %v1042
    %v1044 = vmul.f32 %v1043, 0.03125
    %v1045 = vmul.f32 %v1029, %v1029
    %v1046 = vmul.f32 %v1030, %v1030
    %v1047 = vmul.f32 %v1031, %v1031
    %v1048 = vmul.f32 %v1032, %v1032
    %v1049 = vadd.f32 %v1045, %v1046
    %v1050 = vadd.f32 %v1049, %v1047
    %v1051 = vadd.f32 %v1050, %v1048
    %v1052 = vrot.slane %v1051, 4
    %v1053 = vadd.f32 %v1051, %v1052
    %v1054 = vrot.slane %v1053, 2
    %v1055 = vadd.f32 %v1053, %v1054
    %v1056 = vrot.slane %v1055, 1
    %v1057 = vadd.f32 %v1055, %v1056
    %v1058 = vmul.f32 %v1057, 0.03125
    %v1059 = vmul.f32 %v1044, %v1044
    %v1060 = vsub.f32 %v1058, %v1059
    %v1061 = vmax.f32 %v1060, 0.0
    %v1062 = vadd.f32 %v1061, 1e-05
    %v1063 = vrsqrt.pop %v1062
    %v1064 = vmul.f32 %v1033, %v1063
    %v1066 = vlaneseq
    %v1067 = vshrl.u32 %v1066, 7
    %v1068 = vsub.s32 0, %v1067
    %v1069 = vrot.slane %v1064, %v1068
    %v1071 = vmul.f32 %v1029, %v1069
    %v1072 = vmul.f32 %v1030, %v1069
    %v1073 = vmul.f32 %v1031, %v1069
    %v1074 = vmul.f32 %v1032, %v1069
    %v1075 = vmul.f32 %v1044, %v1064
    %v1076 = vsub.f32 %v1034, %v1075
    %v1078 = vlaneseq
    %v1079 = vshrl.u32 %v1078, 7
    %v1080 = vsub.s32 0, %v1079
    %v1081 = vrot.slane %v1076, %v1080
    %v1083 = vadd.f32 %v1071, %v1081
    %v1084 = vadd.f32 %v1072, %v1081
    %v1085 = vadd.f32 %v1073, %v1081
    %v1086 = vadd.f32 %v1074, %v1081
    %v1087 = vadd.f32 %v1083, %v588
    %v1088 = vadd.f32 %v1084, %v591
    %v1089 = vadd.f32 %v1085, %v596
    %v1090 = vadd.f32 %v1086, %v599
    %v1091 = vmax.f32 %v1087, 0.0
    %v1092 = vmax.f32 %v1088, 0.0
    %v1093 = vmax.f32 %v1089, 0.0
    %v1094 = vmax.f32 %v1090, 0.0
    %1095 = vst [vmem:[#allocation10] sm:$0xff] %v1091
    %1096 = vst [vmem:[#allocation10 + $0x8] sm:$0xff] %v1092
    %1097 = vst [vmem:[#allocation10 + $0x10] sm:$0xff] %v1093
    %1098 = vst [vmem:[#allocation10 + $0x18] sm:$0xff] %v1094
    // Predicated region
    $region54: #{tpu_custom_call.1} parent=1 // pred_check
      _
    $region55: #{tpu_custom_call.1} parent=1 // pred_check_branch
      %1100 = sbr.rel (0) target = $region57
    $region56: #{tpu_custom_call.1} parent=1 // pred_region
      %s1102 = ssub.s32 512, 512
      %1103 = vsyncadd [#allocation4], %s1102
      %s1104 = sshll.u32 [#allocation10], 4
      %s1105 = int_to_ptr.vmem [resolvable:$true] %s1104
      %1110 = dma.vmem_to_hbm [thread:$0]  %s1105, 512, %s9, [#allocation4], 128, 128, 8
    $region57: #{tpu_custom_call.1} parent=1 // pred_fallthru
      _
    // Predicated region
    $region58: #{tpu_custom_call.1} parent=1 // pred_check
      _
    $region59: #{tpu_custom_call.1} parent=1 // pred_check_branch
      %1112 = sbr.rel (0) target = $region61
    $region60: #{tpu_custom_call.1} parent=1 // pred_region
      %1113 = dma.done [#allocation4], 512
    $region61: #{tpu_custom_call.1} parent=1 // pred_fallthru
      _
    %1114 = vsyncpa [#allocation3], 1
    %1115 = vsyncpa [#allocation6], 1
    %1116 = vsyncpa [#allocation9], 1
    %1117 = vsyncpa [#allocation4], 1

</llo_original>
